<compile_context>
chip_gen: v7x
topology: tpu7x:2x2x1
jax: 0.10.0
libtpu: 0.0.40
codegen_flags: <defaults>
</compile_context>

<pallas_src>
import jax
import jax.numpy as jnp
from jax.experimental import pallas as pl
from jax.experimental.pallas import tpu as pltpu


# ---------------------------------------------------------------------------
# Kernel body (static L, fully unrolled, two-pass single-accumulator form)
# ---------------------------------------------------------------------------
def _make_kernel(L):
    def kernel(gwT_ref, gb_ref, *refs):
        # gwT_ref : (S, L)   gate Linear(seq_len, 1) weights, transposed (resident)
        # gb_ref  : (1, L)   gate biases (resident)
        # refs    : L input refs of shape (b_tile, S, c_tile) + out_ref (same shape)
        x_refs = refs[:L]
        out_ref = refs[L]

        W = gwT_ref[...].astype(jnp.float32)        # (S, L)  tiny
        bias = gb_ref[...].astype(jnp.float32)      # (1, L)  tiny

        # ---- Pass 1: per-layer gates (tiny (b,1,c) vectors) -----------------
        # gate_l[b, c] = sigmoid( sum_s w_l[s] * x_l[b, s, c] + bias_l )
        gates = []
        for l in range(L):                          # static L -> unrolled
            x = x_refs[l][...].astype(jnp.float32)              # (b, S, c)
            w = W[:, l:l + 1][None, :, :]                       # (1, S, 1)
            logit = jnp.sum(x * w, axis=1, keepdims=True)       # (b, 1, c)
            logit = logit + bias[:, l:l + 1]                    # broadcast (1,1)
            gates.append(jax.nn.sigmoid(logit))

        gate_sum = gates[0]
        for l in range(1, L):
            gate_sum = gate_sum + gates[l]                      # G = sum_l g_l

        # ---- Pass 2: single block-sized accumulator -------------------------
        # fused = 0.5 * sum_l [ (L-2)*g_l + G ] * x_l   (exact pairwise rewrite)
        fused = None
        for l in range(L):
            coef = 0.5 * (float(L - 2) * gates[l] + gate_sum)   # (b, 1, c) tiny
            x = x_refs[l][...].astype(jnp.float32)              # re-read from VMEM
            contrib = coef * x
            fused = contrib if fused is None else fused + contrib

        out_ref[...] = fused.astype(out_ref.dtype)

    return kernel


# ---------------------------------------------------------------------------
# VMEM-aware tiling
# ---------------------------------------------------------------------------
_TARGET_BLOCK_BYTES = 1 << 20   # ~1 MiB/layer block ~= 85%+ of measured DMA roofline


def _vmem_budget_bytes():
    """(tile working-set budget, vmem_limit_bytes) derived from the chip's VMEM."""
    cap = 64 << 20                      # conservative default: v7x per-TC VMEM
    try:
        info = pltpu.get_tpu_info()
        cap = int(getattr(info, "vmem_capacity_bytes", cap)) or cap
    except Exception:
        pass
    tile_budget = int(cap * 0.70)       # double-buffered blocks + accumulator
    vmem_limit = int(cap * 0.85)        # scoped VMEM limit handed to Mosaic
    return tile_budget, vmem_limit


def _pick_tiles(B, S, Cp, L, in_bytes, out_bytes, budget):
    """Pick (b_tile, c_tile): smallest block reaching ~1 MiB per layer that fits
    the VMEM budget (keeps the grid long for megacore); otherwise the largest
    block that fits."""

    def footprint(b, c):
        elems = b * S * c
        # 2x double-buffered inputs + 2x double-buffered output + ~2 f32 temps
        return elems * (2 * L * in_bytes + 2 * out_bytes + 2 * 4)

    def blk_bytes(bc):
        b, c = bc
        return b * S * c * in_bytes

    c_cands = [c for c in range(128, Cp + 1, 128) if Cp % c == 0]  # lane-dense
    b_cands = [b for b in range(1, B + 1) if B % b == 0]

    fitting = [(b, c) for c in c_cands for b in b_cands
               if footprint(b, c) <= budget]
    if not fitting:
        # TODO(synk): would need S-axis tiling / stacked-L path for shapes this big.
        return 1, 128

    big_enough = [bc for bc in fitting if blk_bytes(bc) >= _TARGET_BLOCK_BYTES]
    if big_enough:
        # smallest block that already saturates DMA; prefer wider c (lane-dense rows)
        return min(big_enough, key=lambda bc: (blk_bytes(bc), -bc[1]))
    return max(fitting, key=lambda bc: (blk_bytes(bc), bc[1]))


# ---------------------------------------------------------------------------
# Wrapper
# ---------------------------------------------------------------------------
def gated_fusion_dynamic(layer_outputs, gate_w, gate_b, fc_out_w, fc_out_b):
    """layer_outputs: list of L arrays (B, S, C) in the PyTorch input layout.
    gate_w: (L, 1, S), gate_b: (L, 1, 1). Returns (B, S, C)."""
    # fc_output's result is discarded in the PyTorch forward -> dead parameters.
    del fc_out_w, fc_out_b

    L = len(layer_outputs)
    B, S, C = layer_outputs[0].shape
    dtype = layer_outputs[0].dtype

    gw_t = jnp.transpose(gate_w.reshape(L, S), (1, 0))   # (S, L)  tiny
    gb = gate_b.reshape(1, L)                            # (1, L)  tiny

    # Lane-dense channels: pad C to a multiple of 128 (padded lanes hold zeros,
    # contribute zero to the fusion, and are sliced off afterwards).
    Cp = ((C + 127) // 128) * 128
    if Cp != C:
        pad = ((0, 0), (0, 0), (0, Cp - C))
        layer_outputs = [jnp.pad(x, pad) for x in layer_outputs]

    in_bytes = jnp.dtype(dtype).itemsize
    tile_budget, vmem_limit = _vmem_budget_bytes()
    b_tile, c_tile = _pick_tiles(B, S, Cp, L, in_bytes, in_bytes, tile_budget)

    grid = (B // b_tile, Cp // c_tile)
    x_spec = pl.BlockSpec((b_tile, S, c_tile), lambda b, c: (b, 0, c))
    grid_spec = pltpu.PrefetchScalarGridSpec(
        num_scalar_prefetch=0,
        grid=grid,
        in_specs=[
            pl.BlockSpec((S, L), lambda b, c: (0, 0)),   # gate weights (resident)
            pl.BlockSpec((1, L), lambda b, c: (0, 0)),   # gate biases  (resident)
        ] + [x_spec] * L,
        out_specs=pl.BlockSpec((b_tile, S, c_tile), lambda b, c: (b, 0, c)),
    )

    out = pl.pallas_call(
        _make_kernel(L),
        out_shape=jax.ShapeDtypeStruct((B, S, Cp), dtype),
        grid_spec=grid_spec,
        compiler_params=pltpu.CompilerParams(
            dimension_semantics=("parallel", "parallel"),
            vmem_limit_bytes=vmem_limit),
    )(gw_t, gb, *layer_outputs)

    if Cp != C:
        out = out[:, :, :C]
    return out


# ---------------------------------------------------------------------------
# Pure-JAX reference (direct pairwise port of the PyTorch forward)
# ---------------------------------------------------------------------------
def gated_fusion_reference(layer_outputs, gate_w, gate_b):
    L = len(layer_outputs)
    y = [jnp.transpose(x, (0, 2, 1)) for x in layer_outputs]        # (B, C, S)
    gates = []
    for i in range(L):
        logit = jnp.einsum("bcs,s->bc", y[i], gate_w[i, 0])[..., None] + gate_b[i, 0, 0]
        gates.append(jax.nn.sigmoid(logit))                         # (B, C, 1)
    fused = jnp.zeros_like(y[0])
    for i in range(L):
        for j in range(i + 1, L):
            fused = fused + (gates[i] + gates[j]) * 0.5 * (y[i] + y[j])
    return jnp.transpose(fused, (0, 2, 1))                          # (B, S, C)


def _run_case(key, layer_num, B, S, C):
    k_inputs, k_gw, k_gb, k_ow, k_ob = jax.random.split(key, 5)
    in_keys = jax.random.split(k_inputs, layer_num)
    layer_outputs = [
        jax.random.normal(in_keys[i], (B, S, C), dtype=jnp.float32)
        for i in range(layer_num)
    ]
    # nn.Linear-style uniform(-1/sqrt(in), 1/sqrt(in)) init
    bound = 1.0 / (S ** 0.5)
    gate_w = jax.random.uniform(k_gw, (layer_num, 1, S), jnp.float32, -bound, bound)
    gate_b = jax.random.uniform(k_gb, (layer_num, 1, 1), jnp.float32, -bound, bound)
    fc_out_w = jax.random.uniform(k_ow, (S, S), jnp.float32, -bound, bound)  # dead (discarded)
    fc_out_b = jax.random.uniform(k_ob, (S,), jnp.float32, -bound, bound)    # dead (discarded)

    out = gated_fusion_dynamic(layer_outputs, gate_w, gate_b, fc_out_w, fc_out_b)
    out = jax.block_until_ready(out)

    ref = gated_fusion_reference(layer_outputs, gate_w, gate_b)
    assert out.shape == (B, S, C), out.shape
    assert jnp.allclose(out, ref, atol=1e-5, rtol=1e-5), "kernel mismatch vs reference"


if __name__ == "__main__":
    key = jax.random.PRNGKey(0)
    k1, k2, k3 = jax.random.split(key, 3)
    # Small shape matching the module spec (layer_num=3, (B, seq_len, C) = (2, 16, 8));
    # exercises the C-padding (8 -> 128) lane-dense path.
    _run_case(k1, layer_num=3, B=2, S=16, C=8)
    # C already a multiple of 128, single-block grid.
    _run_case(k2, layer_num=3, B=2, S=64, C=256)
    # Larger case: exercises batch tiling + C tiling (grid with >1 step per axis).
    _run_case(k3, layer_num=3, B=4, S=512, C=1024)
    print("KERNEL_OK")
</pallas_src>

<mosaic_0001>
module attributes {stable_mosaic.version = 11 : i64} {
  func.func @kernel(%arg0: i32, %arg1: i32, %arg2: memref<16x3xf32, #tpu.memory_space<vmem>>, %arg3: memref<1x3xf32, #tpu.memory_space<vmem>>, %arg4: memref<2x16x128xf32, #tpu.memory_space<vmem>>, %arg5: memref<2x16x128xf32, #tpu.memory_space<vmem>>, %arg6: memref<2x16x128xf32, #tpu.memory_space<vmem>>, %arg7: memref<2x16x128xf32, #tpu.memory_space<vmem>>) attributes {dimension_semantics = [#tpu.dimension_semantics<parallel>, #tpu.dimension_semantics<parallel>], iteration_bounds = array<i64: 1, 1>, scalar_prefetch = 0 : i64, scratch_operands = 0 : i64, tpu.core_type = #tpu.core_type<tc>, window_params = [{pipeline_mode = #tpu.pipeline_mode<synchronous>, transform_indices = @transform_0, window_bounds = array<i64: 16, 3>}, {pipeline_mode = #tpu.pipeline_mode<synchronous>, transform_indices = @transform_1, window_bounds = array<i64: 1, 3>}, {transform_indices = @transform_2, window_bounds = array<i64: 2, 16, 128>}, {transform_indices = @transform_3, window_bounds = array<i64: 2, 16, 128>}, {transform_indices = @transform_4, window_bounds = array<i64: 2, 16, 128>}, {transform_indices = @transform_5, window_bounds = array<i64: 2, 16, 128>}]} {
    %c0 = arith.constant 0 : index
    %c0_0 = arith.constant 0 : index
    %0 = vector.load %arg2[%c0, %c0_0] : memref<16x3xf32, #tpu.memory_space<vmem>>, vector<16x3xf32>
    %c0_1 = arith.constant 0 : index
    %c0_2 = arith.constant 0 : index
    %1 = vector.load %arg3[%c0_1, %c0_2] : memref<1x3xf32, #tpu.memory_space<vmem>>, vector<1x3xf32>
    %c0_3 = arith.constant 0 : index
    %c0_4 = arith.constant 0 : index
    %c0_5 = arith.constant 0 : index
    %2 = vector.load %arg4[%c0_3, %c0_4, %c0_5] : memref<2x16x128xf32, #tpu.memory_space<vmem>>, vector<2x16x128xf32>
    %3 = vector.extract_strided_slice %0 {offsets = [0, 0], sizes = [16, 1], strides = [1, 1]} : vector<16x3xf32> to vector<16x1xf32>
    %4 = vector.shape_cast %3 : vector<16x1xf32> to vector<1x16x1xf32>
    %5 = vector.broadcast %4 : vector<1x16x1xf32> to vector<2x16x128xf32>
    %6 = arith.mulf %2, %5 : vector<2x16x128xf32>
    %cst = arith.constant dense<0.000000e+00> : vector<2x128xf32>
    %7 = vector.multi_reduction <add>, %6, %cst [1] : vector<2x16x128xf32> to vector<2x128xf32>
    %8 = vector.shape_cast %7 : vector<2x128xf32> to vector<2x1x128xf32>
    %9 = vector.extract_strided_slice %1 {offsets = [0, 0], sizes = [1, 1], strides = [1, 1]} : vector<1x3xf32> to vector<1x1xf32>
    %10 = vector.shape_cast %9 : vector<1x1xf32> to vector<1x1x1xf32>
    %11 = vector.broadcast %10 : vector<1x1x1xf32> to vector<2x1x128xf32>
    %12 = arith.addf %8, %11 : vector<2x1x128xf32>
    %13 = arith.negf %12 : vector<2x1x128xf32>
    %14 = math.exp %13 : vector<2x1x128xf32>
    %cst_6 = arith.constant 1.000000e+00 : f32
    %15 = vector.broadcast %cst_6 : f32 to vector<2x1x128xf32>
    %16 = arith.addf %15, %14 : vector<2x1x128xf32>
    %17 = arith.divf %15, %16 : vector<2x1x128xf32>
    %c0_7 = arith.constant 0 : index
    %c0_8 = arith.constant 0 : index
    %c0_9 = arith.constant 0 : index
    %18 = vector.load %arg5[%c0_7, %c0_8, %c0_9] : memref<2x16x128xf32, #tpu.memory_space<vmem>>, vector<2x16x128xf32>
    %19 = vector.extract_strided_slice %0 {offsets = [0, 1], sizes = [16, 1], strides = [1, 1]} : vector<16x3xf32> to vector<16x1xf32>
    %20 = vector.shape_cast %19 : vector<16x1xf32> to vector<1x16x1xf32>
    %21 = vector.broadcast %20 : vector<1x16x1xf32> to vector<2x16x128xf32>
    %22 = arith.mulf %18, %21 : vector<2x16x128xf32>
    %cst_10 = arith.constant dense<0.000000e+00> : vector<2x128xf32>
    %23 = vector.multi_reduction <add>, %22, %cst_10 [1] : vector<2x16x128xf32> to vector<2x128xf32>
    %24 = vector.shape_cast %23 : vector<2x128xf32> to vector<2x1x128xf32>
    %25 = vector.extract_strided_slice %1 {offsets = [0, 1], sizes = [1, 1], strides = [1, 1]} : vector<1x3xf32> to vector<1x1xf32>
    %26 = vector.shape_cast %25 : vector<1x1xf32> to vector<1x1x1xf32>
    %27 = vector.broadcast %26 : vector<1x1x1xf32> to vector<2x1x128xf32>
    %28 = arith.addf %24, %27 : vector<2x1x128xf32>
    %29 = arith.negf %28 : vector<2x1x128xf32>
    %30 = math.exp %29 : vector<2x1x128xf32>
    %cst_11 = arith.constant 1.000000e+00 : f32
    %31 = vector.broadcast %cst_11 : f32 to vector<2x1x128xf32>
    %32 = arith.addf %31, %30 : vector<2x1x128xf32>
    %33 = arith.divf %31, %32 : vector<2x1x128xf32>
    %c0_12 = arith.constant 0 : index
    %c0_13 = arith.constant 0 : index
    %c0_14 = arith.constant 0 : index
    %34 = vector.load %arg6[%c0_12, %c0_13, %c0_14] : memref<2x16x128xf32, #tpu.memory_space<vmem>>, vector<2x16x128xf32>
    %35 = vector.extract_strided_slice %0 {offsets = [0, 2], sizes = [16, 1], strides = [1, 1]} : vector<16x3xf32> to vector<16x1xf32>
    %36 = vector.shape_cast %35 : vector<16x1xf32> to vector<1x16x1xf32>
    %37 = vector.broadcast %36 : vector<1x16x1xf32> to vector<2x16x128xf32>
    %38 = arith.mulf %34, %37 : vector<2x16x128xf32>
    %cst_15 = arith.constant dense<0.000000e+00> : vector<2x128xf32>
    %39 = vector.multi_reduction <add>, %38, %cst_15 [1] : vector<2x16x128xf32> to vector<2x128xf32>
    %40 = vector.shape_cast %39 : vector<2x128xf32> to vector<2x1x128xf32>
    %41 = vector.extract_strided_slice %1 {offsets = [0, 2], sizes = [1, 1], strides = [1, 1]} : vector<1x3xf32> to vector<1x1xf32>
    %42 = vector.shape_cast %41 : vector<1x1xf32> to vector<1x1x1xf32>
    %43 = vector.broadcast %42 : vector<1x1x1xf32> to vector<2x1x128xf32>
    %44 = arith.addf %40, %43 : vector<2x1x128xf32>
    %45 = arith.negf %44 : vector<2x1x128xf32>
    %46 = math.exp %45 : vector<2x1x128xf32>
    %cst_16 = arith.constant 1.000000e+00 : f32
    %47 = vector.broadcast %cst_16 : f32 to vector<2x1x128xf32>
    %48 = arith.addf %47, %46 : vector<2x1x128xf32>
    %49 = arith.divf %47, %48 : vector<2x1x128xf32>
    %50 = arith.addf %17, %33 : vector<2x1x128xf32>
    %51 = arith.addf %50, %49 : vector<2x1x128xf32>
    %cst_17 = arith.constant 1.000000e+00 : f32
    %52 = vector.broadcast %cst_17 : f32 to vector<2x1x128xf32>
    %53 = arith.mulf %52, %17 : vector<2x1x128xf32>
    %54 = arith.addf %53, %51 : vector<2x1x128xf32>
    %cst_18 = arith.constant 5.000000e-01 : f32
    %55 = vector.broadcast %cst_18 : f32 to vector<2x1x128xf32>
    %56 = arith.mulf %55, %54 : vector<2x1x128xf32>
    %c0_19 = arith.constant 0 : index
    %c0_20 = arith.constant 0 : index
    %c0_21 = arith.constant 0 : index
    %57 = vector.load %arg4[%c0_19, %c0_20, %c0_21] : memref<2x16x128xf32, #tpu.memory_space<vmem>>, vector<2x16x128xf32>
    %58 = vector.broadcast %56 : vector<2x1x128xf32> to vector<2x16x128xf32>
    %59 = arith.mulf %58, %57 : vector<2x16x128xf32>
    %cst_22 = arith.constant 1.000000e+00 : f32
    %60 = vector.broadcast %cst_22 : f32 to vector<2x1x128xf32>
    %61 = arith.mulf %60, %33 : vector<2x1x128xf32>
    %62 = arith.addf %61, %51 : vector<2x1x128xf32>
    %cst_23 = arith.constant 5.000000e-01 : f32
    %63 = vector.broadcast %cst_23 : f32 to vector<2x1x128xf32>
    %64 = arith.mulf %63, %62 : vector<2x1x128xf32>
    %c0_24 = arith.constant 0 : index
    %c0_25 = arith.constant 0 : index
    %c0_26 = arith.constant 0 : index
    %65 = vector.load %arg5[%c0_24, %c0_25, %c0_26] : memref<2x16x128xf32, #tpu.memory_space<vmem>>, vector<2x16x128xf32>
    %66 = vector.broadcast %64 : vector<2x1x128xf32> to vector<2x16x128xf32>
    %67 = arith.mulf %66, %65 : vector<2x16x128xf32>
    %68 = arith.addf %59, %67 : vector<2x16x128xf32>
    %cst_27 = arith.constant 1.000000e+00 : f32
    %69 = vector.broadcast %cst_27 : f32 to vector<2x1x128xf32>
    %70 = arith.mulf %69, %49 : vector<2x1x128xf32>
    %71 = arith.addf %70, %51 : vector<2x1x128xf32>
    %cst_28 = arith.constant 5.000000e-01 : f32
    %72 = vector.broadcast %cst_28 : f32 to vector<2x1x128xf32>
    %73 = arith.mulf %72, %71 : vector<2x1x128xf32>
    %c0_29 = arith.constant 0 : index
    %c0_30 = arith.constant 0 : index
    %c0_31 = arith.constant 0 : index
    %74 = vector.load %arg6[%c0_29, %c0_30, %c0_31] : memref<2x16x128xf32, #tpu.memory_space<vmem>>, vector<2x16x128xf32>
    %75 = vector.broadcast %73 : vector<2x1x128xf32> to vector<2x16x128xf32>
    %76 = arith.mulf %75, %74 : vector<2x16x128xf32>
    %77 = arith.addf %68, %76 : vector<2x16x128xf32>
    %c0_32 = arith.constant 0 : index
    %c0_33 = arith.constant 0 : index
    %c0_34 = arith.constant 0 : index
    %78 = vector.load %arg7[%c0_32, %c0_33, %c0_34] : memref<2x16x128xf32, #tpu.memory_space<vmem>>, vector<2x16x128xf32>
    tpu.vector_store %arg7[%c0_32, %c0_33, %c0_34], %77 {strides = array<i32>} : memref<2x16x128xf32, #tpu.memory_space<vmem>>, vector<2x16x128xf32>,
    return
  }
  func.func @transform_0(%arg0: i32, %arg1: i32) -> (i32, i32) {
    %c0_i32 = arith.constant 0 : i32
    %c0_i32_0 = arith.constant 0 : i32
    %c0_i32_1 = arith.constant 0 : i32
    return %c0_i32, %c0_i32_0 : i32, i32
  }
  func.func @transform_1(%arg0: i32, %arg1: i32) -> (i32, i32) {
    %c0_i32 = arith.constant 0 : i32
    %c0_i32_0 = arith.constant 0 : i32
    %c0_i32_1 = arith.constant 0 : i32
    return %c0_i32, %c0_i32_0 : i32, i32
  }
  func.func @transform_2(%arg0: i32, %arg1: i32) -> (i32, i32, i32) {
    %c0_i32 = arith.constant 0 : i32
    %c0_i32_0 = arith.constant 0 : i32
    return %arg0, %c0_i32, %arg1 : i32, i32, i32
  }
  func.func @transform_3(%arg0: i32, %arg1: i32) -> (i32, i32, i32) {
    %c0_i32 = arith.constant 0 : i32
    %c0_i32_0 = arith.constant 0 : i32
    return %arg0, %c0_i32, %arg1 : i32, i32, i32
  }
  func.func @transform_4(%arg0: i32, %arg1: i32) -> (i32, i32, i32) {
    %c0_i32 = arith.constant 0 : i32
    %c0_i32_0 = arith.constant 0 : i32
    return %arg0, %c0_i32, %arg1 : i32, i32, i32
  }
  func.func @transform_5(%arg0: i32, %arg1: i32) -> (i32, i32, i32) {
    %c0_i32 = arith.constant 0 : i32
    %c0_i32_0 = arith.constant 0 : i32
    return %arg0, %c0_i32, %arg1 : i32, i32, i32
  }
}

</mosaic_0001>

<llo_original>
// kernel: tpu_custom_call.1
$region0: #{tpu_custom_call.1}
  #allocation0 [shape = 'u32[]', space=smem, size = 0x4, offset = 0x4, fixed_abs, tag = 'smem constant byte address 0x4 - core index']
  #allocation1 [shape = 'u32[144,128]{1,0:T(1,128)}', space=vmem, size = 0x12000, scoped, tag = 'internal scratch']
  %s0 = inlined_call_operand.vmem [shape: f32[16,3], index: 0, kind: input, shape index: {}]
  %s1 = inlined_call_operand.vmem [shape: f32[1,3], index: 1, kind: input, shape index: {}]
  %s2 = inlined_call_operand.hbm [shape: f32[2,16,128], index: 2, kind: input, shape index: {}]
  %s3 = inlined_call_operand.hbm [shape: f32[2,16,128], index: 3, kind: input, shape index: {}]
  %s4 = inlined_call_operand.vmem [shape: f32[2,16,128], index: 4, kind: input, shape index: {}]
  %s5 = inlined_call_operand.hbm [shape: f32[2,16,128], index: 5, kind: output, shape index: {}]
  %s6 = sld [smem:[#allocation0]]
  $region38: #{tpu_custom_call.1} parent=0
    _
  %s8 = ssub.s32 1, %s6
  %s9 = scalar_select 0, %s8, %s6
  $region1: #{tpu_custom_call.1} parent=0
    #allocation2 [shape = 'u8[16384]{0}', space=vmem, size = 0x4000, scoped, tag = 'input window, operand 2, single buffered']
    #allocation3 [shape = 's32[1]{0}', space=sflag, size = 0x4, scoped, tag = 'scoped memory for tpu_custom_call.1']
    #allocation4 [shape = 's32[1]{0}', space=sflag, size = 0x4, scoped, tag = 'scoped memory for tpu_custom_call.1']
    #allocation5 [shape = 'u8[16384]{0}', space=vmem, size = 0x4000, scoped, tag = 'input window, operand 3, single buffered']
    #allocation6 [shape = 's32[1]{0}', space=sflag, size = 0x4, scoped, tag = 'scoped memory for tpu_custom_call.1']
    #allocation7 [shape = 'u8[16384]{0}', space=vmem, size = 0x4000, scoped, tag = 'output window, operand 0, single buffered']
    %10 = vsyncpa [#allocation3], 0
    %11 = vsyncpa [#allocation6], 0
    %12 = vsyncpa [#allocation4], 0
    // Predicated region
    $region2: #{tpu_custom_call.1} parent=1 // pred_check
      _
    $region3: #{tpu_custom_call.1} parent=1 // pred_check_branch
      %14 = sbr.rel (0) target = $region5
    $region4: #{tpu_custom_call.1} parent=1 // pred_region
      _
    $region5: #{tpu_custom_call.1} parent=1 // pred_fallthru
      _
    // Predicated region
    $region6: #{tpu_custom_call.1} parent=1 // pred_check
      _
    $region7: #{tpu_custom_call.1} parent=1 // pred_check_branch
      %16 = sbr.rel (0) target = $region9
    $region8: #{tpu_custom_call.1} parent=1 // pred_region
      _
    $region9: #{tpu_custom_call.1} parent=1 // pred_fallthru
      _
    // Predicated region
    $region10: #{tpu_custom_call.1} parent=1 // pred_check
      _
    $region11: #{tpu_custom_call.1} parent=1 // pred_check_branch
      %18 = sbr.rel (0) target = $region13
    $region12: #{tpu_custom_call.1} parent=1 // pred_region
      %s20 = ssub.s32 512, 512
      %21 = vsyncadd [#allocation3], %s20
      %s22 = sshll.u32 [#allocation2], 4
      %s23 = int_to_ptr.vmem [resolvable:$true] %s22
      %28 = dma.hbm_to_vmem [thread:$0]  %s2, 512, %s23, [#allocation3], 128, 128, 8
    $region13: #{tpu_custom_call.1} parent=1 // pred_fallthru
      _
    // Predicated region
    $region14: #{tpu_custom_call.1} parent=1 // pred_check
      _
    $region15: #{tpu_custom_call.1} parent=1 // pred_check_branch
      %30 = sbr.rel (0) target = $region17
    $region16: #{tpu_custom_call.1} parent=1 // pred_region
      %s32 = ssub.s32 512, 512
      %33 = vsyncadd [#allocation6], %s32
      %s34 = sshll.u32 [#allocation5], 4
      %s35 = int_to_ptr.vmem [resolvable:$true] %s34
      %40 = dma.hbm_to_vmem [thread:$0]  %s3, 512, %s35, [#allocation6], 128, 128, 8
    $region17: #{tpu_custom_call.1} parent=1 // pred_fallthru
      _
    // Predicated region
    $region18: #{tpu_custom_call.1} parent=1 // pred_check
      _
    $region19: #{tpu_custom_call.1} parent=1 // pred_check_branch
      %42 = sbr.rel (0) target = $region21
    $region20: #{tpu_custom_call.1} parent=1 // pred_region
      _
    $region21: #{tpu_custom_call.1} parent=1 // pred_fallthru
      _
    // Predicated region
    $region22: #{tpu_custom_call.1} parent=1 // pred_check
      _
    $region23: #{tpu_custom_call.1} parent=1 // pred_check_branch
      %44 = sbr.rel (0) target = $region25
    $region24: #{tpu_custom_call.1} parent=1 // pred_region
      %45 = dma.done [#allocation3], 512
    $region25: #{tpu_custom_call.1} parent=1 // pred_fallthru
      _
    // Predicated region
    $region26: #{tpu_custom_call.1} parent=1 // pred_check
      _
    $region27: #{tpu_custom_call.1} parent=1 // pred_check_branch
      %47 = sbr.rel (0) target = $region29
    $region28: #{tpu_custom_call.1} parent=1 // pred_region
      %48 = dma.done [#allocation6], 512
    $region29: #{tpu_custom_call.1} parent=1 // pred_fallthru
      _
    %v49 = vld [vmem:[%s0] sm:$0xff]
    %v50 = vld [vmem:[%s0 + $0x8] sm:$0xff]
    %v51 = vld [vmem:[%s1] sm:$0x1]
    %v52 = vld [vmem:[#allocation2] sm:$0xff]
    %v53 = vld [vmem:[#allocation2 + $0x8] sm:$0xff]
    %v54 = vld [vmem:[#allocation2 + $0x10] sm:$0xff]
    %v55 = vld [vmem:[#allocation2 + $0x18] sm:$0xff]
    %57 = vset.pattern.permute.xlu0 0
    %58 = vperm.xlu0 %57, %v49
    %v59 = vpop.permute.xlu0 %58
    %62 = vset.pattern.permute.xlu0 0
    %63 = vperm.xlu0 %62, %v50
    %v64 = vpop.permute.xlu0 %63
    %v66 = vmul.f32 %v52, %v59
    %v67 = vmul.f32 %v53, %v64
    %v68 = vmul.f32 %v54, %v59
    %v69 = vmul.f32 %v55, %v64
    %v70 = vadd.f32 %v66, %v67
    %v71 = vrot.slane %v70, 4
    %v72 = vadd.f32 %v70, %v71
    %v73 = vrot.slane %v72, 2
    %v74 = vadd.f32 %v72, %v73
    %v75 = vrot.slane %v74, 1
    %v76 = vadd.f32 %v74, %v75
    %v77 = vadd.f32 %v68, %v69
    %v78 = vrot.slane %v77, 4
    %v79 = vadd.f32 %v77, %v78
    %v80 = vrot.slane %v79, 2
    %v81 = vadd.f32 %v79, %v80
    %v82 = vrot.slane %v81, 1
    %v83 = vadd.f32 %v81, %v82
    %85 = vset.pattern.permute.xlu0 0
    %86 = vperm.xlu0 %85, %v51
    %v87 = vpop.permute.xlu0 %86
    %v89 = vlaneseq
    %v90 = vshrl.u32 %v89, 7
    %v91 = vsub.s32 0, %v90
    %v92 = vrot.slane %v87, %v91
    %v93 = vadd.f32 %v76, %v92
    %v94 = vadd.f32 %v83, %v92
    %v95 = vxor.u32 %v93, 2147483648
    %v96 = vxor.u32 %v94, 2147483648
    %v97 = vmul.f32 %v95, 1.442695
    %v98 = vpow.pop %v97
    %v99 = vmul.f32 %v96, 1.442695
    %v100 = vpow.pop %v99
    %v101 = vadd.f32 %v98, 1.0
    %v102 = vadd.f32 %v100, 1.0
    %v103 = vrcp.pop %v101
    %v104 = vmul.f32 1.0, %v103
    %v105 = vrcp.pop %v102
    %v106 = vmul.f32 1.0, %v105
    %v107 = vld [vmem:[#allocation5] sm:$0xff]
    %v108 = vld [vmem:[#allocation5 + $0x8] sm:$0xff]
    %v109 = vld [vmem:[#allocation5 + $0x10] sm:$0xff]
    %v110 = vld [vmem:[#allocation5 + $0x18] sm:$0xff]
    %111 = vset.pattern.permute.xlu0 1
    %112 = vperm.xlu0 %111, %v49
    %v113 = vpop.permute.xlu0 %112
    %115 = vset.pattern.permute.xlu0 1
    %116 = vperm.xlu0 %115, %v50
    %v117 = vpop.permute.xlu0 %116
    %v119 = vmul.f32 %v107, %v113
    %v120 = vmul.f32 %v108, %v117
    %v121 = vmul.f32 %v109, %v113
    %v122 = vmul.f32 %v110, %v117
    %v123 = vadd.f32 %v119, %v120
    %v124 = vrot.slane %v123, 4
    %v125 = vadd.f32 %v123, %v124
    %v126 = vrot.slane %v125, 2
    %v127 = vadd.f32 %v125, %v126
    %v128 = vrot.slane %v127, 1
    %v129 = vadd.f32 %v127, %v128
    %v130 = vadd.f32 %v121, %v122
    %v131 = vrot.slane %v130, 4
    %v132 = vadd.f32 %v130, %v131
    %v133 = vrot.slane %v132, 2
    %v134 = vadd.f32 %v132, %v133
    %v135 = vrot.slane %v134, 1
    %v136 = vadd.f32 %v134, %v135
    %137 = vset.pattern.permute.xlu0 1
    %138 = vperm.xlu0 %137, %v51
    %v139 = vpop.permute.xlu0 %138
    %v141 = vlaneseq
    %v142 = vshrl.u32 %v141, 7
    %v143 = vsub.s32 0, %v142
    %v144 = vrot.slane %v139, %v143
    %v145 = vadd.f32 %v129, %v144
    %v146 = vadd.f32 %v136, %v144
    %v147 = vxor.u32 %v145, 2147483648
    %v148 = vxor.u32 %v146, 2147483648
    %v149 = vmul.f32 %v147, 1.442695
    %v150 = vpow.pop %v149
    %v151 = vmul.f32 %v148, 1.442695
    %v152 = vpow.pop %v151
    %v153 = vadd.f32 %v150, 1.0
    %v154 = vadd.f32 %v152, 1.0
    %v155 = vrcp.pop %v153
    %v156 = vmul.f32 1.0, %v155
    %v157 = vrcp.pop %v154
    %v158 = vmul.f32 1.0, %v157
    %v159 = vld [vmem:[%s4] sm:$0xff]
    %v160 = vld [vmem:[%s4 + $0x8] sm:$0xff]
    %v161 = vld [vmem:[%s4 + $0x10] sm:$0xff]
    %v162 = vld [vmem:[%s4 + $0x18] sm:$0xff]
    %163 = vset.pattern.permute.xlu0 2
    %164 = vperm.xlu0 %163, %v49
    %v165 = vpop.permute.xlu0 %164
    %167 = vset.pattern.permute.xlu0 2
    %168 = vperm.xlu0 %167, %v50
    %v169 = vpop.permute.xlu0 %168
    %v171 = vmul.f32 %v159, %v165
    %v172 = vmul.f32 %v160, %v169
    %v173 = vmul.f32 %v161, %v165
    %v174 = vmul.f32 %v162, %v169
    %v175 = vadd.f32 %v171, %v172
    %v176 = vrot.slane %v175, 4
    %v177 = vadd.f32 %v175, %v176
    %v178 = vrot.slane %v177, 2
    %v179 = vadd.f32 %v177, %v178
    %v180 = vrot.slane %v179, 1
    %v181 = vadd.f32 %v179, %v180
    %v182 = vadd.f32 %v173, %v174
    %v183 = vrot.slane %v182, 4
    %v184 = vadd.f32 %v182, %v183
    %v185 = vrot.slane %v184, 2
    %v186 = vadd.f32 %v184, %v185
    %v187 = vrot.slane %v186, 1
    %v188 = vadd.f32 %v186, %v187
    %189 = vset.pattern.permute.xlu0 2
    %190 = vperm.xlu0 %189, %v51
    %v191 = vpop.permute.xlu0 %190
    %v193 = vlaneseq
    %v194 = vshrl.u32 %v193, 7
    %v195 = vsub.s32 0, %v194
    %v196 = vrot.slane %v191, %v195
    %v197 = vadd.f32 %v181, %v196
    %v198 = vadd.f32 %v188, %v196
    %v199 = vxor.u32 %v197, 2147483648
    %v200 = vxor.u32 %v198, 2147483648
    %v201 = vmul.f32 %v199, 1.442695
    %v202 = vpow.pop %v201
    %v203 = vmul.f32 %v200, 1.442695
    %v204 = vpow.pop %v203
    %v205 = vadd.f32 %v202, 1.0
    %v206 = vadd.f32 %v204, 1.0
    %v207 = vrcp.pop %v205
    %v208 = vmul.f32 1.0, %v207
    %v209 = vrcp.pop %v206
    %v210 = vmul.f32 1.0, %v209
    %v211 = vadd.f32 %v104, %v156
    %v212 = vadd.f32 %v106, %v158
    %v213 = vadd.f32 %v211, %v208
    %v214 = vadd.f32 %v212, %v210
    %v215 = vadd.f32 %v104, %v213
    %v216 = vadd.f32 %v106, %v214
    %v217 = vmul.f32 %v215, 0.5
    %v218 = vmul.f32 %v216, 0.5
    %v219 = vmul.f32 %v217, %v52
    %v220 = vmul.f32 %v217, %v53
    %v221 = vmul.f32 %v218, %v54
    %v222 = vmul.f32 %v218, %v55
    %v223 = vadd.f32 %v156, %v213
    %v224 = vadd.f32 %v158, %v214
    %v225 = vmul.f32 %v223, 0.5
    %v226 = vmul.f32 %v224, 0.5
    %v227 = vmul.f32 %v225, %v107
    %v228 = vmul.f32 %v225, %v108
    %v229 = vmul.f32 %v226, %v109
    %v230 = vmul.f32 %v226, %v110
    %v231 = vadd.f32 %v219, %v227
    %v232 = vadd.f32 %v220, %v228
    %v233 = vadd.f32 %v221, %v229
    %v234 = vadd.f32 %v222, %v230
    %v235 = vadd.f32 %v208, %v213
    %v236 = vadd.f32 %v210, %v214
    %v237 = vmul.f32 %v235, 0.5
    %v238 = vmul.f32 %v236, 0.5
    %v239 = vmul.f32 %v237, %v159
    %v240 = vmul.f32 %v237, %v160
    %v241 = vmul.f32 %v238, %v161
    %v242 = vmul.f32 %v238, %v162
    %v243 = vadd.f32 %v231, %v239
    %v244 = vadd.f32 %v232, %v240
    %v245 = vadd.f32 %v233, %v241
    %v246 = vadd.f32 %v234, %v242
    %247 = vst [vmem:[#allocation7] sm:$0xff] %v243
    %248 = vst [vmem:[#allocation7 + $0x8] sm:$0xff] %v244
    %249 = vst [vmem:[#allocation7 + $0x10] sm:$0xff] %v245
    %250 = vst [vmem:[#allocation7 + $0x18] sm:$0xff] %v246
    // Predicated region
    $region30: #{tpu_custom_call.1} parent=1 // pred_check
      _
    $region31: #{tpu_custom_call.1} parent=1 // pred_check_branch
      %252 = sbr.rel (0) target = $region33
    $region32: #{tpu_custom_call.1} parent=1 // pred_region
      %s254 = ssub.s32 512, 512
      %255 = vsyncadd [#allocation4], %s254
      %s256 = sshll.u32 [#allocation7], 4
      %s257 = int_to_ptr.vmem [resolvable:$true] %s256
      %262 = dma.vmem_to_hbm [thread:$0]  %s257, 512, %s5, [#allocation4], 128, 128, 8
    $region33: #{tpu_custom_call.1} parent=1 // pred_fallthru
      _
    // Predicated region
    $region34: #{tpu_custom_call.1} parent=1 // pred_check
      _
    $region35: #{tpu_custom_call.1} parent=1 // pred_check_branch
      %264 = sbr.rel (0) target = $region37
    $region36: #{tpu_custom_call.1} parent=1 // pred_region
      %265 = dma.done [#allocation4], 512
    $region37: #{tpu_custom_call.1} parent=1 // pred_fallthru
      _
    %266 = vsyncpa [#allocation3], 1
    %267 = vsyncpa [#allocation6], 1
    %268 = vsyncpa [#allocation4], 1

</llo_original>
